<compile_context>
chip_gen: v6e
topology: v6e:2x2x1
jax: 0.10.0
libtpu: 0.0.40
codegen_flags: <defaults>
</compile_context>

<pallas_src>
import jax
import jax.numpy as jnp
from jax.experimental import pallas as pl
from jax.experimental.pallas import tpu as pltpu

_LANE = 128
_MIB = 1024 * 1024


def _sublane_min(dtype) -> int:
    """Minimal sublane tile for a dtype: 8 (f32), 16 (bf16), 32 (int8)."""
    itemsize = jnp.dtype(dtype).itemsize
    return max(8, 32 // itemsize)


def _tpu_vmem_capacity_bytes() -> int:
    try:
        info = pltpu.get_tpu_info()
        cap = getattr(info, "vmem_capacity_bytes", None)
        if cap:
            return int(cap)
    except Exception:
        pass
    return 128 * _MIB  # v5e / v6e default


def _freq_atten_kernel(w_ref, x_ref, o_ref):
    """w_ref: VMEM (C, 1) f32; x_ref, o_ref: VMEM (Bn, C, T) native dtype."""
    xf = x_ref[...].astype(jnp.float32)                          # (Bn, C, T)
    # Channel reduction: lane-broadcast weight column * tile, sublane sum (XLU).
    s = jnp.sum(xf * w_ref[...], axis=1, keepdims=True)          # (Bn, 1, T) f32
    attn = jax.nn.sigmoid(s)                                     # f32, EUP
    o_ref[...] = (xf * attn).astype(o_ref.dtype)                 # bcast over C


def frequency_atten_layer(x_nchw: jax.Array, weight: jax.Array) -> jax.Array:
    """x_nchw: (N, C, H, W); weight: (1, C, 1, 1) as in nn.Conv2d(C, 1, 1, bias=False)."""
    N, C, H, W = x_nchw.shape
    HW = H * W
    dtype = x_nchw.dtype
    itemsize = jnp.dtype(dtype).itemsize
    c_eff = max(C, _sublane_min(dtype))          # sublane-rounded channel count

    # Per-generation block budget / VMEM limit.
    vmem_cap = _tpu_vmem_capacity_bytes()
    if vmem_cap <= 64 * _MIB:                    # v7x: 64 MiB VMEM per TensorCore
        block_budget = 4 * _MIB
        base_limit = 40 * _MIB
    else:                                        # v5e / v6e: 128 MiB physical VMEM
        block_budget = 8 * _MIB
        base_limit = 48 * _MIB

    # Lane-dense spatial tile: multiple of 128, capped by the block budget.
    hw128 = pl.cdiv(HW, _LANE) * _LANE
    max_t = max(_LANE, (block_budget // (c_eff * itemsize)) // _LANE * _LANE)
    T = min(hw128, max_t)
    num_t = pl.cdiv(HW, T)

    # Pack batch images per block until the budget is reached.
    per_image = c_eff * T * itemsize
    Bn = max(1, min(N, block_budget // per_image))
    if num_t * pl.cdiv(N, Bn) < 2 and N >= 2:
        Bn = pl.cdiv(N, 2)                       # keep >= 2 parallel grid steps
    num_n = pl.cdiv(N, Bn)

    block_bytes = Bn * c_eff * T * itemsize
    vmem_limit = min(
        max(vmem_cap - 32 * _MIB, 16 * _MIB),
        max(base_limit, 4 * block_bytes + 2 * _MIB),   # in+out, double-buffered
    )

    x_flat = x_nchw.reshape(N, C, HW)
    w_col = weight.reshape(C, 1).astype(jnp.float32)

    cost = pl.CostEstimate(
        flops=3 * N * C * HW,                    # reduction MACs + final multiply
        transcendentals=N * HW,                  # sigmoid
        bytes_accessed=2 * N * C * HW * itemsize,
    )

    out_flat = pl.pallas_call(
        _freq_atten_kernel,
        out_shape=jax.ShapeDtypeStruct((N, C, HW), dtype),
        grid_spec=pltpu.PrefetchScalarGridSpec(
            num_scalar_prefetch=0,
            grid=(num_n, num_t),
            in_specs=[
                pl.BlockSpec((C, 1), lambda n, t: (0, 0)),          # weight column
                pl.BlockSpec((Bn, C, T), lambda n, t: (n, 0, t)),   # x tile
            ],
            out_specs=pl.BlockSpec((Bn, C, T), lambda n, t: (n, 0, t)),
        ),
        compiler_params=pltpu.CompilerParams(
            dimension_semantics=("parallel", "parallel"),
            vmem_limit_bytes=int(vmem_limit),
        ),
        cost_estimate=cost,
    )(w_col, x_flat)

    return out_flat.reshape(N, C, H, W)


def _reference(x_nchw, weight):
    # Pure-JAX reference mirroring the PyTorch forward.
    w = weight.reshape(1, -1)                                    # (1, C)
    s = jnp.einsum("oc,nchw->nohw", w, x_nchw)                   # (N, 1, H, W)
    return jax.nn.sigmoid(s) * x_nchw


if __name__ == "__main__":
    key = jax.random.PRNGKey(0)
    k_x, k_w = jax.random.split(key)

    N, C, H, W = 2, 4, 16, 16
    x = jax.random.normal(k_x, (N, C, H, W), dtype=jnp.float32)
    # Deterministic init of the 1x1 conv weight (shape (1, C, 1, 1), no bias).
    weight = 0.1 * jax.random.normal(k_w, (1, C, 1, 1), dtype=jnp.float32)

    out = frequency_atten_layer(x, weight)
    out = jax.block_until_ready(out)

    ref = _reference(x, weight)
    assert out.shape == (N, C, H, W)
    assert jnp.allclose(out, ref, atol=1e-5, rtol=1e-5), "mismatch vs reference"

    print("KERNEL_OK")
</pallas_src>

<mosaic_0001>
module attributes {stable_mosaic.version = 11 : i64} {
  func.func @_freq_atten_kernel(%arg0: i32, %arg1: i32, %arg2: memref<4x1xf32, #tpu.memory_space<vmem>>, %arg3: memref<1x4x256xf32, #tpu.memory_space<vmem>>, %arg4: memref<1x4x256xf32, #tpu.memory_space<vmem>>) attributes {dimension_semantics = [#tpu.dimension_semantics<parallel>, #tpu.dimension_semantics<parallel>], iteration_bounds = array<i64: 2, 1>, scalar_prefetch = 0 : i64, scratch_operands = 0 : i64, tpu.core_type = #tpu.core_type<tc>, window_params = [{pipeline_mode = #tpu.pipeline_mode<synchronous>, transform_indices = @transform_0, window_bounds = array<i64: 4, 1>}, {transform_indices = @transform_1, window_bounds = array<i64: 1, 4, 256>}, {transform_indices = @transform_2, window_bounds = array<i64: 1, 4, 256>}]} {
    %c0 = arith.constant 0 : index
    %c0_0 = arith.constant 0 : index
    %c0_1 = arith.constant 0 : index
    %0 = vector.load %arg3[%c0, %c0_0, %c0_1] : memref<1x4x256xf32, #tpu.memory_space<vmem>>, vector<1x4x256xf32>
    %c0_2 = arith.constant 0 : index
    %c0_3 = arith.constant 0 : index
    %1 = vector.load %arg2[%c0_2, %c0_3] : memref<4x1xf32, #tpu.memory_space<vmem>>, vector<4x1xf32>
    %2 = vector.shape_cast %1 : vector<4x1xf32> to vector<1x4x1xf32>
    %3 = vector.broadcast %2 : vector<1x4x1xf32> to vector<1x4x256xf32>
    %4 = arith.mulf %0, %3 : vector<1x4x256xf32>
    %cst = arith.constant dense<0.000000e+00> : vector<1x256xf32>
    %5 = vector.multi_reduction <add>, %4, %cst [1] : vector<1x4x256xf32> to vector<1x256xf32>
    %6 = vector.shape_cast %5 : vector<1x256xf32> to vector<1x1x256xf32>
    %7 = arith.negf %6 : vector<1x1x256xf32>
    %8 = math.exp %7 : vector<1x1x256xf32>
    %cst_4 = arith.constant 1.000000e+00 : f32
    %9 = vector.broadcast %cst_4 : f32 to vector<1x1x256xf32>
    %10 = arith.addf %9, %8 : vector<1x1x256xf32>
    %11 = arith.divf %9, %10 : vector<1x1x256xf32>
    %12 = vector.broadcast %11 : vector<1x1x256xf32> to vector<1x4x256xf32>
    %13 = arith.mulf %0, %12 : vector<1x4x256xf32>
    %c0_5 = arith.constant 0 : index
    %c0_6 = arith.constant 0 : index
    %c0_7 = arith.constant 0 : index
    %14 = vector.load %arg4[%c0_5, %c0_6, %c0_7] : memref<1x4x256xf32, #tpu.memory_space<vmem>>, vector<1x4x256xf32>
    tpu.vector_store %arg4[%c0_5, %c0_6, %c0_7], %13 {strides = array<i32>} : memref<1x4x256xf32, #tpu.memory_space<vmem>>, vector<1x4x256xf32>,
    return
  }
  func.func @transform_0(%arg0: i32, %arg1: i32) -> (i32, i32) {
    %c0_i32 = arith.constant 0 : i32
    %c0_i32_0 = arith.constant 0 : i32
    %c0_i32_1 = arith.constant 0 : i32
    return %c0_i32, %c0_i32_0 : i32, i32
  }
  func.func @transform_1(%arg0: i32, %arg1: i32) -> (i32, i32, i32) {
    %c0_i32 = arith.constant 0 : i32
    %c0_i32_0 = arith.constant 0 : i32
    return %arg0, %c0_i32, %arg1 : i32, i32, i32
  }
  func.func @transform_2(%arg0: i32, %arg1: i32) -> (i32, i32, i32) {
    %c0_i32 = arith.constant 0 : i32
    %c0_i32_0 = arith.constant 0 : i32
    return %arg0, %c0_i32, %arg1 : i32, i32, i32
  }
}

</mosaic_0001>

<llo_original>
// kernel: tpu_custom_call.1
$region0: #{tpu_custom_call.1}
  #allocation0 [shape = 'u32[]', space=smem, size = 0x4, offset = 0x4, fixed_abs, tag = 'smem constant byte address 0x4 - core index']
  #allocation1 [shape = 'u32[144,128]{1,0:T(1,128)}', space=vmem, size = 0x12000, scoped, tag = 'internal scratch']
  %s0 = inlined_call_operand.vmem [shape: f32[4,1], index: 0, kind: input, shape index: {}]
  %s1 = inlined_call_operand.hbm [shape: f32[2,4,256], index: 1, kind: input, shape index: {}]
  %s2 = inlined_call_operand.hbm [shape: f32[2,4,256], index: 2, kind: output, shape index: {}]
  %s3 = sld [smem:[#allocation0]]
  $region45: #{tpu_custom_call.1} parent=0
    _
  %s5 = ssub.s32 1, %s3
  %s6 = scalar_select 0, %s5, %s3
  $region1: #{tpu_custom_call.1} parent=0
    #allocation2 [shape = 'u8[8192]{0}', space=vmem, size = 0x2000, scoped, tag = 'input window, operand 1']
    #allocation3 [shape = 's32[2]{0}', space=sflag, size = 0x8, scoped, tag = 'scoped memory for tpu_custom_call.1']
    #allocation4 [shape = 's32[2]{0}', space=sflag, size = 0x8, scoped, tag = 'scoped memory for tpu_custom_call.1']
    #allocation5 [shape = 'u8[8192]{0}', space=vmem, size = 0x2000, scoped, tag = 'output window, operand 0']
    %7 = vsyncpa [#allocation3], 0
    %s8 = scalar_lea.sflag [#allocation3], 1
    %9 = vsyncpa %s8, 0
    %10 = vsyncpa [#allocation4], 0
    %s11 = scalar_lea.sflag [#allocation4], 1
    %12 = vsyncpa %s11, 0
    loop: start=0, step=1, limit=4
    $region2: #{tpu_custom_call.1} parent=1 // loop_pre_header
      _
    $region3: #{tpu_custom_call.1} parent=1 // loop_header
      %s14 = sphi 0, %s18
      %p15 = scmp.ge.s32.totalorder %s14, 4
      %s21 = sphi 0, %s33
      %s22 = sphi 0, %s29
      %s23 = sphi 0, %s21
      %s24 = sphi 0, %s22
      %s25 = sphi 0, %s23
      %s26 = sphi 0, %s24
      %s34 = sphi 0, %s34
      %s36 = sphi 0, %s34
      %s37 = sphi 0, %s36
      %s51 = sphi 0, %s37
      %s59 = sphi 0, %s61
      %s62 = sphi 0, %s59
      %s63 = sphi 0, %s62
      %s79 = sphi 0, %s63
      %s87 = sphi 0, %s89
      %s90 = sphi 0, %s87
      %s91 = sphi 0, %s90
      %s107 = sphi 0, %s91
    $region4: #{tpu_custom_call.1} parent=1 // loop_header_branch
      %17 = sbr.rel (%p15) target = $region8
    $region5: #{tpu_custom_call.1} parent=1 // loop_body
      %s19 = ssub.s32 %s14, 1
      %s20 = ssub.s32 %s14, 2
      %s27 = sadd.s32 1, %s22
      %p28 = scmp.ge.s32.totalorder %s27, 1
      %s29 = scalar_select %p28, 0, %s27
      %s30 = sadd.s32 1, %s21
      %s31 = scalar_select %p28, %s30, %s21
      %p32 = scmp.ge.s32.totalorder %s31, 2
      %s33 = scalar_select %p32, 0, %s31
      %s35 = sadd.s32 %s34, 1
      %p38 = scmp.eq.s32.totalorder %s14, 1
      %p39 = scmp.ne.s32.totalorder %s34, %s36
      %p40 = scmp.eq.s32.totalorder %s14, 0
      %p41 = por %p39, %p40
      %p42 = scmp.ne.s32.totalorder %s34, %s36
      %p43 = scmp.eq.s32.totalorder %s19, 1
      %p44 = por %p42, %p43
      %p45 = scmp.ne.s32.totalorder %s36, %s37
      %p46 = scmp.eq.s32.totalorder %s19, 0
      %p47 = por %p45, %p46
      %p48 = scmp.ne.s32.totalorder %s36, %s37
      %p49 = scmp.eq.s32.totalorder %s20, 1
      %p50 = por %p48, %p49
      %p52 = scmp.ne.s32.totalorder %s37, %s51
      %p53 = scmp.eq.s32.totalorder %s20, 0
      %p54 = por %p52, %p53
      %s55 = ssub.s32 %s21, %s33
      %s56 = ssub.s32 %s22, %s29
      %s57 = sor.u32 %s55, %s56
      %p58 = scmp.eq.s32.totalorder %s57, 0
      %s60 = sadd.s32 %s59, 1
      %s61 = scalar_select %p58, %s59, %s60
      %p64 = pneg %p58
      %p65 = scmp.eq.s32.totalorder %s14, 1
      %p66 = por %p64, %p65
      %p67 = scmp.ne.s32.totalorder %s59, %s62
      %p68 = scmp.eq.s32.totalorder %s14, 0
      %p69 = por %p67, %p68
      %p70 = scmp.ne.s32.totalorder %s59, %s62
      %p71 = scmp.eq.s32.totalorder %s19, 1
      %p72 = por %p70, %p71
      %p73 = scmp.ne.s32.totalorder %s62, %s63
      %p74 = scmp.eq.s32.totalorder %s19, 0
      %p75 = por %p73, %p74
      %p76 = scmp.ne.s32.totalorder %s62, %s63
      %p77 = scmp.eq.s32.totalorder %s20, 1
      %p78 = por %p76, %p77
      %p80 = scmp.ne.s32.totalorder %s63, %s79
      %p81 = scmp.eq.s32.totalorder %s20, 0
      %p82 = por %p80, %p81
      %s83 = ssub.s32 %s21, %s33
      %s84 = ssub.s32 %s22, %s29
      %s85 = sor.u32 %s83, %s84
      %p86 = scmp.eq.s32.totalorder %s85, 0
      %s88 = sadd.s32 %s87, 1
      %s89 = scalar_select %p86, %s87, %s88
      %p92 = pneg %p86
      %p93 = scmp.eq.s32.totalorder %s14, 1
      %p94 = por %p92, %p93
      %p95 = scmp.ne.s32.totalorder %s87, %s90
      %p96 = scmp.eq.s32.totalorder %s14, 0
      %p97 = por %p95, %p96
      %p98 = scmp.ne.s32.totalorder %s87, %s90
      %p99 = scmp.eq.s32.totalorder %s19, 1
      %p100 = por %p98, %p99
      %p101 = scmp.ne.s32.totalorder %s90, %s91
      %p102 = scmp.eq.s32.totalorder %s19, 0
      %p103 = por %p101, %p102
      %p104 = scmp.ne.s32.totalorder %s90, %s91
      %p105 = scmp.eq.s32.totalorder %s20, 1
      %p106 = por %p104, %p105
      %p108 = scmp.ne.s32.totalorder %s91, %s107
      %p109 = scmp.eq.s32.totalorder %s20, 0
      %p110 = por %p108, %p109
      %p111 = scmp.le.s32.totalorder 1, %s14
      %p112 = scmp.lt.s32.totalorder %s14, 3
      %p113 = pnand %p111, %p112
      %p114 = pneg %p113
      // Predicated region
      $region9: #{tpu_custom_call.1} parent=5 // pred_check
        _
      $region10: #{tpu_custom_call.1} parent=5 // pred_check_branch
        %116 = sbr.rel (%p113) target = $region12
      $region11: #{tpu_custom_call.1} parent=5 // pred_region
        %s117 = ssub.s32 %s14, 1
        // Predicated region
        $region13: #{tpu_custom_call.1} parent=11 // pred_check
          %p118 = pneg %p47
        $region14: #{tpu_custom_call.1} parent=11 // pred_check_branch
          %120 = sbr.rel (%p118) target = $region16
        $region15: #{tpu_custom_call.1} parent=11 // pred_region
          _
        $region16: #{tpu_custom_call.1} parent=11 // pred_fallthru
          _
      $region12: #{tpu_custom_call.1} parent=5 // pred_fallthru
        _
      %p121 = scmp.lt.s32.totalorder %s14, 2
      // Predicated region
      $region17: #{tpu_custom_call.1} parent=5 // pred_check
        %p122 = pneg %p121
      $region18: #{tpu_custom_call.1} parent=5 // pred_check_branch
        %124 = sbr.rel (%p122) target = $region20
      $region19: #{tpu_custom_call.1} parent=5 // pred_region
        // Predicated region
        $region21: #{tpu_custom_call.1} parent=19 // pred_check
          %p125 = pneg %p69
        $region22: #{tpu_custom_call.1} parent=19 // pred_check_branch
          %127 = sbr.rel (%p125) target = $region24
        $region23: #{tpu_custom_call.1} parent=19 // pred_region
          %s128 = sand.u32 %s59, 1
          %s129 = scalar_lea.sflag [#allocation3], %s128
          %s130 = sand.u32 %s59, 1
          %s131 = smul.addr %s130, 8
          %s132 = scalar_lea.vmem [#allocation2], %s131
          %s133 = smul.u32 2, %s22
          %s135 = ssub.s32 128, 128
          %136 = vsyncadd %s129, %s135
          %s137 = smul.addr %s21, 2
          %s138 = sadd.s32 %s133, %s137
          %s139 = smul.addr %s138, 64
          %s140 = scalar_lea.hbm %s1, %s139
          %s142 = sshll.u32 %s132, 4
          %s143 = int_to_ptr.vmem [resolvable:$true] %s142
          %145 = dma.hbm_to_vmem [thread:$0]  %s140, 128, %s143, %s129
        $region24: #{tpu_custom_call.1} parent=19 // pred_fallthru
          _
      $region20: #{tpu_custom_call.1} parent=5 // pred_fallthru
        _
      %p146 = scmp.le.s32.totalorder 1, %s14
      %p147 = scmp.lt.s32.totalorder %s14, 3
      %p148 = pnand %p146, %p147
      %p149 = pneg %p148
      // Predicated region
      $region25: #{tpu_custom_call.1} parent=5 // pred_check
        _
      $region26: #{tpu_custom_call.1} parent=5 // pred_check_branch
        %151 = sbr.rel (%p148) target = $region28
      $region27: #{tpu_custom_call.1} parent=5 // pred_region
        %s152 = ssub.s32 %s14, 1
        %s153 = sand.u32 %s62, 1
        %s154 = scalar_lea.sflag [#allocation3], %s153
        %s155 = sand.u32 %s62, 1
        %s156 = smul.addr %s155, 8
        %s157 = scalar_lea.vmem [#allocation2], %s156
        // Predicated region
        $region29: #{tpu_custom_call.1} parent=27 // pred_check
          %p158 = pneg %p75
        $region30: #{tpu_custom_call.1} parent=27 // pred_check_branch
          %160 = sbr.rel (%p158) target = $region32
        $region31: #{tpu_custom_call.1} parent=27 // pred_region
          %161 = dma.done %s154, 128
        $region32: #{tpu_custom_call.1} parent=27 // pred_fallthru
          _
        %p162 = pneg %p47
        %p163 = pneg %p44
        %s164 = sand.u32 %s62, 1
        %s165 = scalar_lea.sflag [#allocation3], %s164
        %s166 = sand.u32 %s62, 1
        %s167 = smul.addr %s166, 8
        %s168 = scalar_lea.vmem [#allocation2], %s167
        %p169 = pneg %p75
        %p170 = pneg %p72
        %p171 = pneg %p103
        %p172 = pneg %p100
        %s173 = sand.u32 %s90, 1
        %s174 = scalar_lea.sflag [#allocation4], %s173
        %s175 = sand.u32 %s90, 1
        %s176 = smul.addr %s175, 8
        %s177 = scalar_lea.vmem [#allocation5], %s176
        %s178 = smul.u32 2, %s24
        %s179 = smul.u32 2, %s24
        %v180 = vld [vmem:[%s157] sm:$0xff]
        %v181 = vld [vmem:[%s0] sm:$0xf]
        %183 = vset.pattern.permute.xlu0 0
        %184 = vperm.xlu0 %183, %v181
        %v185 = vpop.permute.xlu0 %184
        %v187 = vunpack.c.l.s4 839922192
        %v188 = vunpack.c.0.s8 %v187
        %v189 = vlaneseq
        %v190 = vshrl.u32 %v189, 7
        %v191 = vsub.s32 %v188, %v190
        %v192 = vrot.slane %v185, %v191
        %v194 = vmul.f32 %v180, %v192
        %v196 = vcombine.high %v194, %v194
        %vm198 = vcmask 1043456
        %v199 = vsel %vm198, %v194, 0.0
        %v200 = vrot.slane %v199, 4
        %v201 = vadd.f32 %v199, %v200
        %v202 = vrot.slane %v201, 2
        %v203 = vadd.f32 %v201, %v202
        %v204 = vrot.slane %v203, 1
        %v205 = vadd.f32 %v203, %v204
        %v206 = vsel %vm198, %v196, 0.0
        %v207 = vrot.slane %v206, 4
        %v208 = vadd.f32 %v206, %v207
        %v209 = vrot.slane %v208, 2
        %v210 = vadd.f32 %v208, %v209
        %v211 = vrot.slane %v210, 1
        %v212 = vadd.f32 %v210, %v211
        %v213 = vxor.u32 %v205, 2147483648
        %v214 = vxor.u32 %v212, 2147483648
        %v215 = vmul.f32 %v213, 1.442695
        %v216 = vpow.pop %v215
        %v217 = vmul.f32 %v214, 1.442695
        %v218 = vpow.pop %v217
        %v219 = vadd.f32 %v216, 1.0
        %v220 = vadd.f32 %v218, 1.0
        %v221 = vrcp.pop %v219
        %v222 = vmul.f32 1.0, %v221
        %v223 = vrcp.pop %v220
        %v224 = vmul.f32 1.0, %v223
        %v227 = vcombine.low %v222, %v224
        %v229 = vmul.f32 %v180, %v227
        %230 = vst [vmem:[%s177] sm:$0xff] %v229
        %s231 = sand.u32 %s90, 1
        %s232 = scalar_lea.sflag [#allocation4], %s231
        %s233 = sand.u32 %s90, 1
        %s234 = smul.addr %s233, 8
        %s235 = scalar_lea.vmem [#allocation5], %s234
        // Predicated region
        $region33: #{tpu_custom_call.1} parent=27 // pred_check
          %p236 = pneg %p100
        $region34: #{tpu_custom_call.1} parent=27 // pred_check_branch
          %238 = sbr.rel (%p236) target = $region36
        $region35: #{tpu_custom_call.1} parent=27 // pred_region
          %s239 = smul.u32 2, %s24
          %s241 = ssub.s32 128, 128
          %242 = vsyncadd %s232, %s241
          %s243 = smul.addr %s23, 2
          %s244 = sadd.s32 %s239, %s243
          %s245 = smul.addr %s244, 64
          %s246 = scalar_lea.hbm %s2, %s245
          %s248 = sshll.u32 %s235, 4
          %s249 = int_to_ptr.vmem [resolvable:$true] %s248
          %251 = dma.vmem_to_hbm [thread:$0]  %s249, 128, %s246, %s232
        $region36: #{tpu_custom_call.1} parent=27 // pred_fallthru
          _
      $region28: #{tpu_custom_call.1} parent=5 // pred_fallthru
        _
      %p252 = scmp.le.s32.totalorder 2, %s14
      // Predicated region
      $region37: #{tpu_custom_call.1} parent=5 // pred_check
        %p253 = pneg %p252
      $region38: #{tpu_custom_call.1} parent=5 // pred_check_branch
        %255 = sbr.rel (%p253) target = $region40
      $region39: #{tpu_custom_call.1} parent=5 // pred_region
        %s256 = ssub.s32 %s14, 2
        // Predicated region
        $region41: #{tpu_custom_call.1} parent=39 // pred_check
          %p257 = pneg %p106
        $region42: #{tpu_custom_call.1} parent=39 // pred_check_branch
          %259 = sbr.rel (%p257) target = $region44
        $region43: #{tpu_custom_call.1} parent=39 // pred_region
          %s260 = sand.u32 %s91, 1
          %s261 = scalar_lea.sflag [#allocation4], %s260
          %s262 = sand.u32 %s91, 1
          %s263 = smul.addr %s262, 8
          %s264 = scalar_lea.vmem [#allocation5], %s263
          %265 = dma.done %s261, 128
        $region44: #{tpu_custom_call.1} parent=39 // pred_fallthru
          _
      $region40: #{tpu_custom_call.1} parent=5 // pred_fallthru
        _
    $region6: #{tpu_custom_call.1} parent=1 // loop_footer
      %s18 = sadd.s32 1, %s14
    $region7: #{tpu_custom_call.1} parent=1 // loop_footer_branch
      %13 = sbr.rel target = $region3
    $region8: #{tpu_custom_call.1} parent=1 // loop_exit
      _
    %266 = vsyncpa [#allocation3], 1
    %s267 = scalar_lea.sflag [#allocation3], 1
    %268 = vsyncpa %s267, 1
    %269 = vsyncpa [#allocation4], 1
    %s270 = scalar_lea.sflag [#allocation4], 1
    %271 = vsyncpa %s270, 1

</llo_original>
